<compile_context>
chip_gen: v7x
topology: tpu7x:2x2x1
jax: 0.10.0
libtpu: 0.0.40
codegen_flags: <defaults>
</compile_context>

<pallas_src>
import functools

import jax
import jax.numpy as jnp
from jax.experimental import pallas as pl
from jax.experimental.pallas import tpu as pltpu


# ----------------------------------------------------------------------------
# Static (trace-time) sizing helpers
# ----------------------------------------------------------------------------
def _round_down_128(v):
    return max(128, (int(v) // 128) * 128)


def _round_up_128(v):
    return ((int(v) + 127) // 128) * 128


def _vmem_budget_bytes():
    """Generation-aware VMEM budget (leave ~25% headroom for Mosaic internals)."""
    try:
        cap = int(pltpu.get_tpu_info().vmem_capacity_bytes)
    except Exception:
        cap = 64 * 1024 * 1024          # assume the tightest budget (v7x per-TC)
    return cap * 3 // 4                 # v7x ~48 MiB, v5e/v6e ~96 MiB


def _pick_tile(S_vox, F_g, F_l, F_int, N, io_itemsize, vmem_budget, tile_s=None):
    """Voxel (lane) tile: multiple of 128, ~4 MiB of HBM traffic per grid step,
    fits the VMEM budget with depth-2 pipelining, and (when N == 1) leaves at
    least 2 grid steps so both v7x TensorCores get work."""
    s_cap = _round_up_128(S_vox)        # a single tile covering the whole volume

    if tile_s is not None:
        tile = min(_round_down_128(tile_s), s_cap)
    else:
        # target ~4 MiB of HBM traffic per grid step (g in + x in + out)
        bytes_per_voxel = (F_g + 2 * F_l) * io_itemsize
        tile = min(_round_down_128((4 * 1024 * 1024) // max(bytes_per_voxel, 1)),
                   s_cap)
        # keep both v7x TensorCores fed when there is only one batch element
        if N == 1 and S_vox > 128:
            tile = min(tile, _round_up_128((S_vox + 1) // 2))

    def _need(t):
        stream = 2 * (F_g + 2 * F_l) * t * io_itemsize   # double-buffered g/x/out
        interm = (F_g + F_l) * t * 4                      # f32 upcasts of the tiles
        interm += 3 * F_int * t * 4                       # g1/x1/relu intermediates
        interm += 4 * t * 4                               # psi / logits rows + slack
        consts = 2 * F_int * (F_g + F_l + 3) * 4          # folded weights (tiny)
        return stream + interm + consts

    while tile > 128 and _need(tile) > vmem_budget:
        tile = _round_down_128(tile // 2)
    return tile


# ----------------------------------------------------------------------------
# Kernel
# ----------------------------------------------------------------------------
def _make_kernel(F_g, F_l, F_int):
    """One (batch, voxel-tile): channel-first [C, ts] blocks, voxels on lanes."""
    use_vpu_channels = max(F_g, F_l, F_int) <= 32   # tiny channels -> VPU MAC
    use_mxu_psi = F_int >= 128                      # big F_int -> psi on the MXU
    c_bgx = F_g + F_l
    c_wp = c_bgx + 1
    c_bp = c_bgx + 2

    def kernel(g_ref, x_ref, c_ref, o_ref):
        # Upcast once: f32 accumulation / sigmoid regardless of I/O dtype.
        g_blk = g_ref[...].astype(jnp.float32)       # [F_g, ts]
        x_blk = x_ref[...].astype(jnp.float32)       # [F_l, ts]
        ts = g_blk.shape[1]

        c = c_ref[...]                               # [F_int, F_g+F_l+3] f32 consts
        wg = c[:, :F_g]                              # [F_int, F_g]
        wx = c[:, F_g:c_bgx]                         # [F_int, F_l]
        bgx = c[:, c_bgx:c_bgx + 1]                  # [F_int, 1] (bg + bx fused)
        wp = c[:, c_wp:c_wp + 1]                     # [F_int, 1]
        bp = c[0:1, c_bp:c_bp + 1]                   # [1, 1]

        if use_vpu_channels:
            # Unrolled VPU MAC over input channels: avoids MXU tile padding and
            # push/pop latency for K,M <= 32; VALU slots are idle here anyway.
            acc = jnp.broadcast_to(bgx, (F_int, ts))
            for ci in range(F_g):
                acc = acc + wg[:, ci:ci + 1] * g_blk[ci:ci + 1, :]
            for ci in range(F_l):
                acc = acc + wx[:, ci:ci + 1] * x_blk[ci:ci + 1, :]
        else:
            # 1x1x1 conv == channel matmul (BN folded). Lane-dense [F_int, ts].
            acc = (jnp.dot(wg, g_blk, preferred_element_type=jnp.float32)
                   + jnp.dot(wx, x_blk, preferred_element_type=jnp.float32)
                   + bgx)
        a = jnp.maximum(acc, 0.0)                    # ReLU

        if use_mxu_psi:
            # M=1 matmul on the otherwise-idle MXU: frees VALU/XLU slots and the
            # extra [F_int, ts] temp the elementwise form would materialize.
            logits = jax.lax.dot_general(
                wp, a, (((0,), (0,)), ((), ())),
                preferred_element_type=jnp.float32) + bp            # [1, ts]
        else:
            # Small F_int: VPU multiply + tiny sublane reduce.
            logits = jnp.sum(a * wp, axis=0, keepdims=True) + bp    # [1, ts]

        psi = jax.nn.sigmoid(logits)                 # [1, ts], lane-dense
        o_ref[...] = (x_blk * psi).astype(o_ref.dtype)

    return kernel


# ----------------------------------------------------------------------------
# Wrapper
# ----------------------------------------------------------------------------
def _fold_bn(w, b, gamma, beta, mean, var, eps=1e-5):
    """Fold eval-mode BatchNorm into a 1x1x1 conv.  w: [Cin, Cout], b: [Cout]."""
    scale = gamma / jnp.sqrt(var + eps)
    w_f = w * scale[None, :]
    b_f = (b - mean) * scale + beta
    return w_f, b_f


@functools.partial(jax.jit, static_argnames=("tile_s", "io_dtype"))
def attention_block(g, x, params, tile_s=None, io_dtype=None):
    """g, x: NCDHW arrays with identical batch/spatial shapes.

    io_dtype: optional streaming dtype for g/x/out (e.g. jnp.bfloat16 halves
    HBM bytes; accumulation stays f32 inside the kernel).  The demo casts in
    the wrapper; in a real network the activations would already be bf16."""
    assert g.shape[0] == x.shape[0] and g.shape[2:] == x.shape[2:], \
        "spatial/batch mismatch (interpolation branch not implemented)"
    N, F_g = g.shape[0], g.shape[1]
    F_l = x.shape[1]
    D, H, W = x.shape[2:]
    S_vox = D * H * W
    F_int = params["wg"].shape[1]
    io_dt = jnp.dtype(io_dtype) if io_dtype is not None else jnp.dtype(x.dtype)

    # Fold BN into the convs (parameter setup = plain JAX glue, tiny arrays).
    wg_f, bg_f = _fold_bn(params["wg"], params["bg"], params["g_gamma"],
                          params["g_beta"], params["g_mean"], params["g_var"])
    wx_f, bx_f = _fold_bn(params["wx"], params["bx"], params["x_gamma"],
                          params["x_beta"], params["x_mean"], params["x_var"])
    wp_f, bp_f = _fold_bn(params["wp"], params["bp"], params["p_gamma"],
                          params["p_beta"], params["p_mean"], params["p_var"])

    # One merged constant block: [Wg^T | Wx^T | (bg+bx) | Wpsi | bpsi]
    # -> a single small DMA stream instead of five.
    consts = jnp.concatenate(
        [wg_f.T.astype(jnp.float32),                          # [F_int, F_g]
         wx_f.T.astype(jnp.float32),                          # [F_int, F_l]
         (bg_f + bx_f).reshape(F_int, 1).astype(jnp.float32),
         wp_f.reshape(F_int, 1).astype(jnp.float32),
         jnp.broadcast_to(bp_f.reshape(1, 1), (F_int, 1)).astype(jnp.float32)],
        axis=1)                                               # [F_int, F_g+F_l+3]
    n_const_cols = F_g + F_l + 3

    # NCDHW -> (N, C, S_vox): contiguous-dim merge => free view, no transpose.
    g3 = g.astype(io_dt).reshape(N, F_g, S_vox)
    x3 = x.astype(io_dt).reshape(N, F_l, S_vox)

    vmem_budget = _vmem_budget_bytes()
    tile = _pick_tile(S_vox, F_g, F_l, F_int, N, io_dt.itemsize, vmem_budget,
                      tile_s)
    n_tiles = (S_vox + tile - 1) // tile

    out = pl.pallas_call(
        _make_kernel(F_g, F_l, F_int),
        out_shape=jax.ShapeDtypeStruct((N, F_l, S_vox), io_dt),
        grid_spec=pltpu.PrefetchScalarGridSpec(
            num_scalar_prefetch=0,
            grid=(N, n_tiles),
            in_specs=[
                pl.BlockSpec((None, F_g, tile), lambda n, s: (n, 0, s)),   # g tile
                pl.BlockSpec((None, F_l, tile), lambda n, s: (n, 0, s)),   # x tile
                pl.BlockSpec((F_int, n_const_cols), lambda n, s: (0, 0)),  # consts
            ],
            out_specs=pl.BlockSpec((None, F_l, tile), lambda n, s: (n, 0, s)),
        ),
        compiler_params=pltpu.CompilerParams(
            dimension_semantics=("parallel", "parallel"),
            vmem_limit_bytes=int(vmem_budget)),
    )(g3, x3, consts)

    return out.reshape(N, F_l, D, H, W)                       # NCDHW, free view


# ----------------------------------------------------------------------------
# Parameters + pure-JAX reference
# ----------------------------------------------------------------------------
def init_params(key, F_g, F_l, F_int):
    """Deterministic synthetic parameters matching the module's shapes.

    Conv3d weights are kernel_size=1, so they are stored directly as
    [Cin, Cout] matrices (== PyTorch weight[:, :, 0, 0, 0].T)."""
    ks = jax.random.split(key, 6)
    p = {
        "wg": jax.random.normal(ks[0], (F_g, F_int), jnp.float32) * 0.2,
        "bg": jax.random.normal(ks[1], (F_int,), jnp.float32) * 0.1,
        "wx": jax.random.normal(ks[2], (F_l, F_int), jnp.float32) * 0.2,
        "bx": jax.random.normal(ks[3], (F_int,), jnp.float32) * 0.1,
        "wp": jax.random.normal(ks[4], (F_int, 1), jnp.float32) * 0.2,
        "bp": jax.random.normal(ks[5], (1,), jnp.float32) * 0.1,
        # BatchNorm (eval mode) parameters / running stats, non-trivial values.
        "g_gamma": jnp.linspace(0.9, 1.1, F_int), "g_beta": jnp.linspace(-0.05, 0.05, F_int),
        "g_mean": jnp.linspace(-0.1, 0.1, F_int), "g_var": jnp.linspace(0.8, 1.2, F_int),
        "x_gamma": jnp.linspace(1.1, 0.9, F_int), "x_beta": jnp.linspace(0.05, -0.05, F_int),
        "x_mean": jnp.linspace(0.1, -0.1, F_int), "x_var": jnp.linspace(1.2, 0.8, F_int),
        "p_gamma": jnp.array([1.05], jnp.float32), "p_beta": jnp.array([0.02], jnp.float32),
        "p_mean": jnp.array([0.03], jnp.float32), "p_var": jnp.array([0.95], jnp.float32),
    }
    return p


def _reference(g, x, p, eps=1e-5):
    """Pure-JAX reference of the same (eval-mode BN) forward pass."""
    def branch(inp, w, b, gamma, beta, mean, var):
        z = jnp.einsum("ncdhw,co->nodhw", inp, w) + b[None, :, None, None, None]
        return (gamma[None, :, None, None, None] *
                (z - mean[None, :, None, None, None]) /
                jnp.sqrt(var[None, :, None, None, None] + eps) +
                beta[None, :, None, None, None])
    g1 = branch(g, p["wg"], p["bg"], p["g_gamma"], p["g_beta"], p["g_mean"], p["g_var"])
    x1 = branch(x, p["wx"], p["bx"], p["x_gamma"], p["x_beta"], p["x_mean"], p["x_var"])
    a = jnp.maximum(g1 + x1, 0.0)
    psi = jax.nn.sigmoid(branch(a, p["wp"], p["bp"], p["p_gamma"], p["p_beta"],
                                p["p_mean"], p["p_var"]))
    return x * psi


if __name__ == "__main__":
    key = jax.random.PRNGKey(0)
    k_g, k_x, k_p, k_g2, k_x2, k_p2 = jax.random.split(key, 6)

    # --- test 1: tiny channels (VPU-MAC path), f32 I/O ------------------------
    N, F_g, F_l, F_int = 2, 8, 8, 4
    D, H, W = 4, 8, 8
    g = jax.random.normal(k_g, (N, F_g, D, H, W), jnp.float32)
    x = jax.random.normal(k_x, (N, F_l, D, H, W), jnp.float32)
    params = init_params(k_p, F_g, F_l, F_int)

    out = jax.block_until_ready(attention_block(g, x, params))
    ref = _reference(g, x, params)
    assert out.shape == x.shape and out.dtype == x.dtype, (out.shape, out.dtype)
    assert jnp.allclose(out, ref, atol=1e-5, rtol=1e-5), \
        float(jnp.max(jnp.abs(out - ref)))

    # --- test 2: same inputs, bf16 I/O (half the HBM bytes) -------------------
    out_bf = jax.block_until_ready(
        attention_block(g, x, params, io_dtype=jnp.bfloat16))
    assert out_bf.dtype == jnp.bfloat16
    err_bf = float(jnp.max(jnp.abs(out_bf.astype(jnp.float32) - ref)))
    assert err_bf < 5e-2, err_bf

    # --- test 3: medium channels (MXU channel-matmul path), N=1 ---------------
    N2, F_g2, F_l2, F_int2 = 1, 64, 64, 32
    g2 = jax.random.normal(k_g2, (N2, F_g2, D, H, W), jnp.float32)
    x2 = jax.random.normal(k_x2, (N2, F_l2, D, H, W), jnp.float32)
    params2 = init_params(k_p2, F_g2, F_l2, F_int2)
    out2 = jax.block_until_ready(attention_block(g2, x2, params2))
    ref2 = _reference(g2, x2, params2)
    assert jnp.allclose(out2, ref2, atol=2e-2, rtol=2e-2), \
        float(jnp.max(jnp.abs(out2 - ref2)))

    print("KERNEL_OK")
</pallas_src>

<mosaic_0001>
module attributes {stable_mosaic.version = 11 : i64} {
  func.func @kernel(%arg0: i32, %arg1: i32, %arg2: memref<1x8x256xf32, #tpu.memory_space<vmem>>, %arg3: memref<1x8x256xf32, #tpu.memory_space<vmem>>, %arg4: memref<4x19xf32, #tpu.memory_space<vmem>>, %arg5: memref<1x8x256xf32, #tpu.memory_space<vmem>>) attributes {dimension_semantics = [#tpu.dimension_semantics<parallel>, #tpu.dimension_semantics<parallel>], iteration_bounds = array<i64: 2, 1>, scalar_prefetch = 0 : i64, scratch_operands = 0 : i64, tpu.core_type = #tpu.core_type<tc>, window_params = [{transform_indices = @transform_0, window_bounds = array<i64: 1, 8, 256>}, {transform_indices = @transform_1, window_bounds = array<i64: 1, 8, 256>}, {pipeline_mode = #tpu.pipeline_mode<synchronous>, transform_indices = @transform_2, window_bounds = array<i64: 4, 19>}, {transform_indices = @transform_3, window_bounds = array<i64: 1, 8, 256>}]} {
    %c0 = arith.constant 0 : index
    %c0_0 = arith.constant 0 : index
    %c0_1 = arith.constant 0 : index
    %0 = vector.load %arg2[%c0, %c0_0, %c0_1] : memref<1x8x256xf32, #tpu.memory_space<vmem>>, vector<1x8x256xf32>
    %1 = vector.shape_cast %0 : vector<1x8x256xf32> to vector<8x256xf32>
    %c0_2 = arith.constant 0 : index
    %c0_3 = arith.constant 0 : index
    %c0_4 = arith.constant 0 : index
    %2 = vector.load %arg3[%c0_2, %c0_3, %c0_4] : memref<1x8x256xf32, #tpu.memory_space<vmem>>, vector<1x8x256xf32>
    %3 = vector.shape_cast %2 : vector<1x8x256xf32> to vector<8x256xf32>
    %c0_5 = arith.constant 0 : index
    %c0_6 = arith.constant 0 : index
    %4 = vector.load %arg4[%c0_5, %c0_6] : memref<4x19xf32, #tpu.memory_space<vmem>>, vector<4x19xf32>
    %5 = vector.extract_strided_slice %4 {offsets = [0, 0], sizes = [4, 8], strides = [1, 1]} : vector<4x19xf32> to vector<4x8xf32>
    %6 = vector.extract_strided_slice %4 {offsets = [0, 8], sizes = [4, 8], strides = [1, 1]} : vector<4x19xf32> to vector<4x8xf32>
    %7 = vector.extract_strided_slice %4 {offsets = [0, 16], sizes = [4, 1], strides = [1, 1]} : vector<4x19xf32> to vector<4x1xf32>
    %8 = vector.extract_strided_slice %4 {offsets = [0, 17], sizes = [4, 1], strides = [1, 1]} : vector<4x19xf32> to vector<4x1xf32>
    %9 = vector.extract_strided_slice %4 {offsets = [0, 18], sizes = [1, 1], strides = [1, 1]} : vector<4x19xf32> to vector<1x1xf32>
    %10 = vector.shape_cast %7 : vector<4x1xf32> to vector<4x1xf32>
    %11 = vector.broadcast %10 : vector<4x1xf32> to vector<4x256xf32>
    %12 = vector.extract_strided_slice %5 {offsets = [0, 0], sizes = [4, 1], strides = [1, 1]} : vector<4x8xf32> to vector<4x1xf32>
    %13 = vector.extract_strided_slice %1 {offsets = [0, 0], sizes = [1, 256], strides = [1, 1]} : vector<8x256xf32> to vector<1x256xf32>
    %14 = vector.broadcast %12 : vector<4x1xf32> to vector<4x256xf32>
    %15 = vector.broadcast %13 : vector<1x256xf32> to vector<4x256xf32>
    %16 = arith.mulf %14, %15 : vector<4x256xf32>
    %17 = arith.addf %11, %16 : vector<4x256xf32>
    %18 = vector.extract_strided_slice %5 {offsets = [0, 1], sizes = [4, 1], strides = [1, 1]} : vector<4x8xf32> to vector<4x1xf32>
    %19 = vector.extract_strided_slice %1 {offsets = [1, 0], sizes = [1, 256], strides = [1, 1]} : vector<8x256xf32> to vector<1x256xf32>
    %20 = vector.broadcast %18 : vector<4x1xf32> to vector<4x256xf32>
    %21 = vector.broadcast %19 : vector<1x256xf32> to vector<4x256xf32>
    %22 = arith.mulf %20, %21 : vector<4x256xf32>
    %23 = arith.addf %17, %22 : vector<4x256xf32>
    %24 = vector.extract_strided_slice %5 {offsets = [0, 2], sizes = [4, 1], strides = [1, 1]} : vector<4x8xf32> to vector<4x1xf32>
    %25 = vector.extract_strided_slice %1 {offsets = [2, 0], sizes = [1, 256], strides = [1, 1]} : vector<8x256xf32> to vector<1x256xf32>
    %26 = vector.broadcast %24 : vector<4x1xf32> to vector<4x256xf32>
    %27 = vector.broadcast %25 : vector<1x256xf32> to vector<4x256xf32>
    %28 = arith.mulf %26, %27 : vector<4x256xf32>
    %29 = arith.addf %23, %28 : vector<4x256xf32>
    %30 = vector.extract_strided_slice %5 {offsets = [0, 3], sizes = [4, 1], strides = [1, 1]} : vector<4x8xf32> to vector<4x1xf32>
    %31 = vector.extract_strided_slice %1 {offsets = [3, 0], sizes = [1, 256], strides = [1, 1]} : vector<8x256xf32> to vector<1x256xf32>
    %32 = vector.broadcast %30 : vector<4x1xf32> to vector<4x256xf32>
    %33 = vector.broadcast %31 : vector<1x256xf32> to vector<4x256xf32>
    %34 = arith.mulf %32, %33 : vector<4x256xf32>
    %35 = arith.addf %29, %34 : vector<4x256xf32>
    %36 = vector.extract_strided_slice %5 {offsets = [0, 4], sizes = [4, 1], strides = [1, 1]} : vector<4x8xf32> to vector<4x1xf32>
    %37 = vector.extract_strided_slice %1 {offsets = [4, 0], sizes = [1, 256], strides = [1, 1]} : vector<8x256xf32> to vector<1x256xf32>
    %38 = vector.broadcast %36 : vector<4x1xf32> to vector<4x256xf32>
    %39 = vector.broadcast %37 : vector<1x256xf32> to vector<4x256xf32>
    %40 = arith.mulf %38, %39 : vector<4x256xf32>
    %41 = arith.addf %35, %40 : vector<4x256xf32>
    %42 = vector.extract_strided_slice %5 {offsets = [0, 5], sizes = [4, 1], strides = [1, 1]} : vector<4x8xf32> to vector<4x1xf32>
    %43 = vector.extract_strided_slice %1 {offsets = [5, 0], sizes = [1, 256], strides = [1, 1]} : vector<8x256xf32> to vector<1x256xf32>
    %44 = vector.broadcast %42 : vector<4x1xf32> to vector<4x256xf32>
    %45 = vector.broadcast %43 : vector<1x256xf32> to vector<4x256xf32>
    %46 = arith.mulf %44, %45 : vector<4x256xf32>
    %47 = arith.addf %41, %46 : vector<4x256xf32>
    %48 = vector.extract_strided_slice %5 {offsets = [0, 6], sizes = [4, 1], strides = [1, 1]} : vector<4x8xf32> to vector<4x1xf32>
    %49 = vector.extract_strided_slice %1 {offsets = [6, 0], sizes = [1, 256], strides = [1, 1]} : vector<8x256xf32> to vector<1x256xf32>
    %50 = vector.broadcast %48 : vector<4x1xf32> to vector<4x256xf32>
    %51 = vector.broadcast %49 : vector<1x256xf32> to vector<4x256xf32>
    %52 = arith.mulf %50, %51 : vector<4x256xf32>
    %53 = arith.addf %47, %52 : vector<4x256xf32>
    %54 = vector.extract_strided_slice %5 {offsets = [0, 7], sizes = [4, 1], strides = [1, 1]} : vector<4x8xf32> to vector<4x1xf32>
    %55 = vector.extract_strided_slice %1 {offsets = [7, 0], sizes = [1, 256], strides = [1, 1]} : vector<8x256xf32> to vector<1x256xf32>
    %56 = vector.broadcast %54 : vector<4x1xf32> to vector<4x256xf32>
    %57 = vector.broadcast %55 : vector<1x256xf32> to vector<4x256xf32>
    %58 = arith.mulf %56, %57 : vector<4x256xf32>
    %59 = arith.addf %53, %58 : vector<4x256xf32>
    %60 = vector.extract_strided_slice %6 {offsets = [0, 0], sizes = [4, 1], strides = [1, 1]} : vector<4x8xf32> to vector<4x1xf32>
    %61 = vector.extract_strided_slice %3 {offsets = [0, 0], sizes = [1, 256], strides = [1, 1]} : vector<8x256xf32> to vector<1x256xf32>
    %62 = vector.broadcast %60 : vector<4x1xf32> to vector<4x256xf32>
    %63 = vector.broadcast %61 : vector<1x256xf32> to vector<4x256xf32>
    %64 = arith.mulf %62, %63 : vector<4x256xf32>
    %65 = arith.addf %59, %64 : vector<4x256xf32>
    %66 = vector.extract_strided_slice %6 {offsets = [0, 1], sizes = [4, 1], strides = [1, 1]} : vector<4x8xf32> to vector<4x1xf32>
    %67 = vector.extract_strided_slice %3 {offsets = [1, 0], sizes = [1, 256], strides = [1, 1]} : vector<8x256xf32> to vector<1x256xf32>
    %68 = vector.broadcast %66 : vector<4x1xf32> to vector<4x256xf32>
    %69 = vector.broadcast %67 : vector<1x256xf32> to vector<4x256xf32>
    %70 = arith.mulf %68, %69 : vector<4x256xf32>
    %71 = arith.addf %65, %70 : vector<4x256xf32>
    %72 = vector.extract_strided_slice %6 {offsets = [0, 2], sizes = [4, 1], strides = [1, 1]} : vector<4x8xf32> to vector<4x1xf32>
    %73 = vector.extract_strided_slice %3 {offsets = [2, 0], sizes = [1, 256], strides = [1, 1]} : vector<8x256xf32> to vector<1x256xf32>
    %74 = vector.broadcast %72 : vector<4x1xf32> to vector<4x256xf32>
    %75 = vector.broadcast %73 : vector<1x256xf32> to vector<4x256xf32>
    %76 = arith.mulf %74, %75 : vector<4x256xf32>
    %77 = arith.addf %71, %76 : vector<4x256xf32>
    %78 = vector.extract_strided_slice %6 {offsets = [0, 3], sizes = [4, 1], strides = [1, 1]} : vector<4x8xf32> to vector<4x1xf32>
    %79 = vector.extract_strided_slice %3 {offsets = [3, 0], sizes = [1, 256], strides = [1, 1]} : vector<8x256xf32> to vector<1x256xf32>
    %80 = vector.broadcast %78 : vector<4x1xf32> to vector<4x256xf32>
    %81 = vector.broadcast %79 : vector<1x256xf32> to vector<4x256xf32>
    %82 = arith.mulf %80, %81 : vector<4x256xf32>
    %83 = arith.addf %77, %82 : vector<4x256xf32>
    %84 = vector.extract_strided_slice %6 {offsets = [0, 4], sizes = [4, 1], strides = [1, 1]} : vector<4x8xf32> to vector<4x1xf32>
    %85 = vector.extract_strided_slice %3 {offsets = [4, 0], sizes = [1, 256], strides = [1, 1]} : vector<8x256xf32> to vector<1x256xf32>
    %86 = vector.broadcast %84 : vector<4x1xf32> to vector<4x256xf32>
    %87 = vector.broadcast %85 : vector<1x256xf32> to vector<4x256xf32>
    %88 = arith.mulf %86, %87 : vector<4x256xf32>
    %89 = arith.addf %83, %88 : vector<4x256xf32>
    %90 = vector.extract_strided_slice %6 {offsets = [0, 5], sizes = [4, 1], strides = [1, 1]} : vector<4x8xf32> to vector<4x1xf32>
    %91 = vector.extract_strided_slice %3 {offsets = [5, 0], sizes = [1, 256], strides = [1, 1]} : vector<8x256xf32> to vector<1x256xf32>
    %92 = vector.broadcast %90 : vector<4x1xf32> to vector<4x256xf32>
    %93 = vector.broadcast %91 : vector<1x256xf32> to vector<4x256xf32>
    %94 = arith.mulf %92, %93 : vector<4x256xf32>
    %95 = arith.addf %89, %94 : vector<4x256xf32>
    %96 = vector.extract_strided_slice %6 {offsets = [0, 6], sizes = [4, 1], strides = [1, 1]} : vector<4x8xf32> to vector<4x1xf32>
    %97 = vector.extract_strided_slice %3 {offsets = [6, 0], sizes = [1, 256], strides = [1, 1]} : vector<8x256xf32> to vector<1x256xf32>
    %98 = vector.broadcast %96 : vector<4x1xf32> to vector<4x256xf32>
    %99 = vector.broadcast %97 : vector<1x256xf32> to vector<4x256xf32>
    %100 = arith.mulf %98, %99 : vector<4x256xf32>
    %101 = arith.addf %95, %100 : vector<4x256xf32>
    %102 = vector.extract_strided_slice %6 {offsets = [0, 7], sizes = [4, 1], strides = [1, 1]} : vector<4x8xf32> to vector<4x1xf32>
    %103 = vector.extract_strided_slice %3 {offsets = [7, 0], sizes = [1, 256], strides = [1, 1]} : vector<8x256xf32> to vector<1x256xf32>
    %104 = vector.broadcast %102 : vector<4x1xf32> to vector<4x256xf32>
    %105 = vector.broadcast %103 : vector<1x256xf32> to vector<4x256xf32>
    %106 = arith.mulf %104, %105 : vector<4x256xf32>
    %107 = arith.addf %101, %106 : vector<4x256xf32>
    %cst = arith.constant 0.000000e+00 : f32
    %108 = vector.broadcast %cst : f32 to vector<4x256xf32>
    %109 = arith.maximumf %107, %108 : vector<4x256xf32>
    %110 = vector.broadcast %8 : vector<4x1xf32> to vector<4x256xf32>
    %111 = arith.mulf %109, %110 : vector<4x256xf32>
    %cst_7 = arith.constant dense<0.000000e+00> : vector<256xf32>
    %112 = vector.multi_reduction <add>, %111, %cst_7 [0] : vector<4x256xf32> to vector<256xf32>
    %113 = vector.shape_cast %112 : vector<256xf32> to vector<1x256xf32>
    %114 = vector.broadcast %9 : vector<1x1xf32> to vector<1x256xf32>
    %115 = arith.addf %113, %114 : vector<1x256xf32>
    %116 = arith.negf %115 : vector<1x256xf32>
    %117 = math.exp %116 : vector<1x256xf32>
    %cst_8 = arith.constant 1.000000e+00 : f32
    %118 = vector.broadcast %cst_8 : f32 to vector<1x256xf32>
    %119 = arith.addf %118, %117 : vector<1x256xf32>
    %120 = arith.divf %118, %119 : vector<1x256xf32>
    %121 = vector.broadcast %120 : vector<1x256xf32> to vector<8x256xf32>
    %122 = arith.mulf %3, %121 : vector<8x256xf32>
    %c0_9 = arith.constant 0 : index
    %c0_10 = arith.constant 0 : index
    %c0_11 = arith.constant 0 : index
    %123 = vector.load %arg5[%c0_9, %c0_10, %c0_11] : memref<1x8x256xf32, #tpu.memory_space<vmem>>, vector<1x8x256xf32>
    %124 = vector.shape_cast %123 : vector<1x8x256xf32> to vector<8x256xf32>
    %125 = vector.shape_cast %122 : vector<8x256xf32> to vector<1x8x256xf32>
    tpu.vector_store %arg5[%c0_9, %c0_10, %c0_11], %125 {strides = array<i32>} : memref<1x8x256xf32, #tpu.memory_space<vmem>>, vector<1x8x256xf32>,
    return
  }
  func.func @transform_0(%arg0: i32, %arg1: i32) -> (i32, i32, i32) {
    %c0_i32 = arith.constant 0 : i32
    %c0_i32_0 = arith.constant 0 : i32
    return %arg0, %c0_i32, %arg1 : i32, i32, i32
  }
  func.func @transform_1(%arg0: i32, %arg1: i32) -> (i32, i32, i32) {
    %c0_i32 = arith.constant 0 : i32
    %c0_i32_0 = arith.constant 0 : i32
    return %arg0, %c0_i32, %arg1 : i32, i32, i32
  }
  func.func @transform_2(%arg0: i32, %arg1: i32) -> (i32, i32) {
    %c0_i32 = arith.constant 0 : i32
    %c0_i32_0 = arith.constant 0 : i32
    %c0_i32_1 = arith.constant 0 : i32
    return %c0_i32, %c0_i32_0 : i32, i32
  }
  func.func @transform_3(%arg0: i32, %arg1: i32) -> (i32, i32, i32) {
    %c0_i32 = arith.constant 0 : i32
    %c0_i32_0 = arith.constant 0 : i32
    return %arg0, %c0_i32, %arg1 : i32, i32, i32
  }
}

</mosaic_0001>

<llo_original>
// kernel: attention_block.1
$region0: #{attention_block.1}
  #allocation0 [shape = 'u32[]', space=smem, size = 0x4, offset = 0x4, fixed_abs, tag = 'smem constant byte address 0x4 - core index']
  #allocation1 [shape = 'u32[144,128]{1,0:T(1,128)}', space=vmem, size = 0x12000, scoped, tag = 'internal scratch']
  %s0 = inlined_call_operand.vmem [shape: f32[2,8,256], index: 0, kind: input, shape index: {}]
  %s1 = inlined_call_operand.vmem [shape: f32[2,8,256], index: 1, kind: input, shape index: {}]
  %s2 = inlined_call_operand.vmem [shape: f32[4,19], index: 2, kind: input, shape index: {}]
  %s3 = inlined_call_operand.vmem [shape: f32[2,8,256], index: 3, kind: output, shape index: {}]
  %s4 = sld [smem:[#allocation0]]
  $region45: #{attention_block.1} parent=0
    _
  %s6 = ssub.s32 1, %s4
  %s7 = scalar_select 0, %s6, %s4
  loop: start=0, step=1, limit=4
  $region2: #{attention_block.1} parent=0 // loop_pre_header
    _
  $region3: #{attention_block.1} parent=0 // loop_header
    %s9 = sphi 0, %s13
    %p10 = scmp.ge.s32.totalorder %s9, 4
    %s16 = sphi 0, %s28
    %s17 = sphi 0, %s24
    %s18 = sphi 0, %s16
    %s19 = sphi 0, %s17
    %s20 = sphi 0, %s18
    %s21 = sphi 0, %s19
    %s33 = sphi 0, %s35
    %s36 = sphi 0, %s33
    %s37 = sphi 0, %s36
    %s53 = sphi 0, %s37
    %s61 = sphi 0, %s63
    %s64 = sphi 0, %s61
    %s65 = sphi 0, %s64
    %s81 = sphi 0, %s65
    %s85 = sphi 0, %s85
    %s87 = sphi 0, %s85
    %s88 = sphi 0, %s87
    %s102 = sphi 0, %s88
    %s110 = sphi 0, %s112
    %s113 = sphi 0, %s110
    %s114 = sphi 0, %s113
    %s130 = sphi 0, %s114
  $region4: #{attention_block.1} parent=0 // loop_header_branch
    %12 = sbr.rel (%p10) target = $region8
  $region5: #{attention_block.1} parent=0 // loop_body
    %s14 = ssub.s32 %s9, 1
    %s15 = ssub.s32 %s9, 2
    %s22 = sadd.s32 1, %s17
    %p23 = scmp.ge.s32.totalorder %s22, 1
    %s24 = scalar_select %p23, 0, %s22
    %s25 = sadd.s32 1, %s16
    %s26 = scalar_select %p23, %s25, %s16
    %p27 = scmp.ge.s32.totalorder %s26, 2
    %s28 = scalar_select %p27, 0, %s26
    %s29 = ssub.s32 %s16, %s28
    %s30 = ssub.s32 %s17, %s24
    %s31 = sor.u32 %s29, %s30
    %p32 = scmp.eq.s32.totalorder %s31, 0
    %s34 = sadd.s32 %s33, 1
    %s35 = scalar_select %p32, %s33, %s34
    %p38 = pneg %p32
    %p39 = scmp.eq.s32.totalorder %s9, 1
    %p40 = por %p38, %p39
    %p41 = scmp.ne.s32.totalorder %s33, %s36
    %p42 = scmp.eq.s32.totalorder %s9, 0
    %p43 = por %p41, %p42
    %p44 = scmp.ne.s32.totalorder %s33, %s36
    %p45 = scmp.eq.s32.totalorder %s14, 1
    %p46 = por %p44, %p45
    %p47 = scmp.ne.s32.totalorder %s36, %s37
    %p48 = scmp.eq.s32.totalorder %s14, 0
    %p49 = por %p47, %p48
    %p50 = scmp.ne.s32.totalorder %s36, %s37
    %p51 = scmp.eq.s32.totalorder %s15, 1
    %p52 = por %p50, %p51
    %p54 = scmp.ne.s32.totalorder %s37, %s53
    %p55 = scmp.eq.s32.totalorder %s15, 0
    %p56 = por %p54, %p55
    %s57 = ssub.s32 %s16, %s28
    %s58 = ssub.s32 %s17, %s24
    %s59 = sor.u32 %s57, %s58
    %p60 = scmp.eq.s32.totalorder %s59, 0
    %s62 = sadd.s32 %s61, 1
    %s63 = scalar_select %p60, %s61, %s62
    %p66 = pneg %p60
    %p67 = scmp.eq.s32.totalorder %s9, 1
    %p68 = por %p66, %p67
    %p69 = scmp.ne.s32.totalorder %s61, %s64
    %p70 = scmp.eq.s32.totalorder %s9, 0
    %p71 = por %p69, %p70
    %p72 = scmp.ne.s32.totalorder %s61, %s64
    %p73 = scmp.eq.s32.totalorder %s14, 1
    %p74 = por %p72, %p73
    %p75 = scmp.ne.s32.totalorder %s64, %s65
    %p76 = scmp.eq.s32.totalorder %s14, 0
    %p77 = por %p75, %p76
    %p78 = scmp.ne.s32.totalorder %s64, %s65
    %p79 = scmp.eq.s32.totalorder %s15, 1
    %p80 = por %p78, %p79
    %p82 = scmp.ne.s32.totalorder %s65, %s81
    %p83 = scmp.eq.s32.totalorder %s15, 0
    %p84 = por %p82, %p83
    %s86 = sadd.s32 %s85, 1
    %p89 = scmp.eq.s32.totalorder %s9, 1
    %p90 = scmp.ne.s32.totalorder %s85, %s87
    %p91 = scmp.eq.s32.totalorder %s9, 0
    %p92 = por %p90, %p91
    %p93 = scmp.ne.s32.totalorder %s85, %s87
    %p94 = scmp.eq.s32.totalorder %s14, 1
    %p95 = por %p93, %p94
    %p96 = scmp.ne.s32.totalorder %s87, %s88
    %p97 = scmp.eq.s32.totalorder %s14, 0
    %p98 = por %p96, %p97
    %p99 = scmp.ne.s32.totalorder %s87, %s88
    %p100 = scmp.eq.s32.totalorder %s15, 1
    %p101 = por %p99, %p100
    %p103 = scmp.ne.s32.totalorder %s88, %s102
    %p104 = scmp.eq.s32.totalorder %s15, 0
    %p105 = por %p103, %p104
    %s106 = ssub.s32 %s16, %s28
    %s107 = ssub.s32 %s17, %s24
    %s108 = sor.u32 %s106, %s107
    %p109 = scmp.eq.s32.totalorder %s108, 0
    %s111 = sadd.s32 %s110, 1
    %s112 = scalar_select %p109, %s110, %s111
    %p115 = pneg %p109
    %p116 = scmp.eq.s32.totalorder %s9, 1
    %p117 = por %p115, %p116
    %p118 = scmp.ne.s32.totalorder %s110, %s113
    %p119 = scmp.eq.s32.totalorder %s9, 0
    %p120 = por %p118, %p119
    %p121 = scmp.ne.s32.totalorder %s110, %s113
    %p122 = scmp.eq.s32.totalorder %s14, 1
    %p123 = por %p121, %p122
    %p124 = scmp.ne.s32.totalorder %s113, %s114
    %p125 = scmp.eq.s32.totalorder %s14, 0
    %p126 = por %p124, %p125
    %p127 = scmp.ne.s32.totalorder %s113, %s114
    %p128 = scmp.eq.s32.totalorder %s15, 1
    %p129 = por %p127, %p128
    %p131 = scmp.ne.s32.totalorder %s114, %s130
    %p132 = scmp.eq.s32.totalorder %s15, 0
    %p133 = por %p131, %p132
    %p134 = scmp.le.s32.totalorder 1, %s9
    %p135 = scmp.lt.s32.totalorder %s9, 3
    %p136 = pnand %p134, %p135
    %p137 = pneg %p136
    // Predicated region
    $region9: #{attention_block.1} parent=5 // pred_check
      _
    $region10: #{attention_block.1} parent=5 // pred_check_branch
      %139 = sbr.rel (%p136) target = $region12
    $region11: #{attention_block.1} parent=5 // pred_region
      %s140 = ssub.s32 %s9, 1
      // Predicated region
      $region13: #{attention_block.1} parent=11 // pred_check
        %p141 = pneg %p98
      $region14: #{attention_block.1} parent=11 // pred_check_branch
        %143 = sbr.rel (%p141) target = $region16
      $region15: #{attention_block.1} parent=11 // pred_region
        _
      $region16: #{attention_block.1} parent=11 // pred_fallthru
        _
    $region12: #{attention_block.1} parent=5 // pred_fallthru
      _
    %p144 = scmp.lt.s32.totalorder %s9, 2
    // Predicated region
    $region17: #{attention_block.1} parent=5 // pred_check
      %p145 = pneg %p144
    $region18: #{attention_block.1} parent=5 // pred_check_branch
      %147 = sbr.rel (%p145) target = $region20
    $region19: #{attention_block.1} parent=5 // pred_region
      // Predicated region
      $region21: #{attention_block.1} parent=19 // pred_check
        %p148 = pneg %p43
      $region22: #{attention_block.1} parent=19 // pred_check_branch
        %150 = sbr.rel (%p148) target = $region24
      $region23: #{attention_block.1} parent=19 // pred_region
        %s151 = smul.u32 2, %s17
        %p152 = scmp.lt.s32.totalorder %s16, 1
        %s153 = scalar_select %p152, %s16, 1
        %p154 = scmp.lt.s32.totalorder %s151, 1
        %s155 = scalar_select %p154, %s151, 1
        %s156 = smul.addr %s153, 2
        %s157 = sadd.s32 %s155, %s156
        %s158 = smul.addr %s157, 8
        %s159 = scalar_lea.vmem %s0, %s158
        %s160 = smul.u32 2, %s17
      $region24: #{attention_block.1} parent=19 // pred_fallthru
        _
      // Predicated region
      $region25: #{attention_block.1} parent=19 // pred_check
        %p161 = pneg %p71
      $region26: #{attention_block.1} parent=19 // pred_check_branch
        %163 = sbr.rel (%p161) target = $region28
      $region27: #{attention_block.1} parent=19 // pred_region
        %s164 = smul.u32 2, %s17
        %p165 = scmp.lt.s32.totalorder %s16, 1
        %s166 = scalar_select %p165, %s16, 1
        %p167 = scmp.lt.s32.totalorder %s164, 1
        %s168 = scalar_select %p167, %s164, 1
        %s169 = smul.addr %s166, 2
        %s170 = sadd.s32 %s168, %s169
        %s171 = smul.addr %s170, 8
        %s172 = scalar_lea.vmem %s1, %s171
        %s173 = smul.u32 2, %s17
      $region28: #{attention_block.1} parent=19 // pred_fallthru
        _
    $region20: #{attention_block.1} parent=5 // pred_fallthru
      _
    %p174 = scmp.le.s32.totalorder 1, %s9
    %p175 = scmp.lt.s32.totalorder %s9, 3
    %p176 = pnand %p174, %p175
    %p177 = pneg %p176
    // Predicated region
    $region29: #{attention_block.1} parent=5 // pred_check
      _
    $region30: #{attention_block.1} parent=5 // pred_check_branch
      %179 = sbr.rel (%p176) target = $region32
    $region31: #{attention_block.1} parent=5 // pred_region
      %s180 = ssub.s32 %s9, 1
      %s181 = smul.u32 2, %s19
      %p182 = scmp.lt.s32.totalorder %s18, 1
      %s183 = scalar_select %p182, %s18, 1
      %p184 = scmp.lt.s32.totalorder %s181, 1
      %s185 = scalar_select %p184, %s181, 1
      %s186 = smul.addr %s183, 2
      %s187 = sadd.s32 %s185, %s186
      %s188 = smul.addr %s187, 8
      %s189 = scalar_lea.vmem %s0, %s188
      %p190 = pneg %p49
      %p191 = pneg %p46
      %s192 = smul.u32 2, %s19
      %p193 = scmp.lt.s32.totalorder %s18, 1
      %s194 = scalar_select %p193, %s18, 1
      %p195 = scmp.lt.s32.totalorder %s192, 1
      %s196 = scalar_select %p195, %s192, 1
      %s197 = smul.addr %s194, 2
      %s198 = sadd.s32 %s196, %s197
      %s199 = smul.addr %s198, 8
      %s200 = scalar_lea.vmem %s1, %s199
      %p201 = pneg %p77
      %p202 = pneg %p74
      %p203 = pneg %p98
      %p204 = pneg %p95
      %p205 = pneg %p126
      %p206 = pneg %p123
      %s207 = smul.u32 2, %s19
      %p208 = scmp.lt.s32.totalorder %s18, 1
      %s209 = scalar_select %p208, %s18, 1
      %p210 = scmp.lt.s32.totalorder %s207, 1
      %s211 = scalar_select %p210, %s207, 1
      %s212 = smul.addr %s209, 2
      %s213 = sadd.s32 %s211, %s212
      %s214 = smul.addr %s213, 8
      %s215 = scalar_lea.vmem %s3, %s214
      %s216 = smul.u32 2, %s19
      %p217 = scmp.lt.s32.totalorder %s18, 1
      %s218 = scalar_select %p217, %s18, 1
      %p219 = scmp.lt.s32.totalorder %s216, 1
      %s220 = scalar_select %p219, %s216, 1
      %s221 = smul.addr %s218, 2
      %s222 = sadd.s32 %s220, %s221
      %s223 = smul.addr %s222, 8
      %s224 = scalar_lea.vmem %s0, %s223
      %s225 = smul.u32 2, %s19
      %s226 = smul.u32 2, %s19
      %p227 = scmp.lt.s32.totalorder %s18, 1
      %s228 = scalar_select %p227, %s18, 1
      %p229 = scmp.lt.s32.totalorder %s226, 1
      %s230 = scalar_select %p229, %s226, 1
      %s231 = smul.addr %s228, 2
      %s232 = sadd.s32 %s230, %s231
      %s233 = smul.addr %s232, 8
      %s234 = scalar_lea.vmem %s1, %s233
      %s235 = smul.u32 2, %s19
      %s236 = smul.u32 2, %s19
      %p237 = scmp.lt.s32.totalorder %s18, 1
      %s238 = scalar_select %p237, %s18, 1
      %p239 = scmp.lt.s32.totalorder %s236, 1
      %s240 = scalar_select %p239, %s236, 1
      %s241 = smul.addr %s238, 2
      %s242 = sadd.s32 %s240, %s241
      %s243 = smul.addr %s242, 8
      %s244 = scalar_lea.vmem %s3, %s243
      %s245 = smul.u32 2, %s19
      %v246 = vld [vmem:[%s224] sm:$0xff]
      %v247 = vld [vmem:[%s224 + $0x8] sm:$0xff]
      %v248 = vld [vmem:[%s234] sm:$0xff]
      %v249 = vld [vmem:[%s234 + $0x8] sm:$0xff]
      %v250 = vld [vmem:[%s2] sm:$0xf]
      %252 = vset.pattern.permute.xlu0 16
      %253 = vperm.xlu0 %252, %v250
      %v254 = vpop.permute.xlu0 %253
      %256 = vset.pattern.permute.xlu0 0
      %257 = vperm.xlu0 %256, %v250
      %v258 = vpop.permute.xlu0 %257
      %v260 = vlaneseq
      %v261 = vshrl.u32 %v260, 7
      %v262 = vsub.s32 0, %v261
      %v263 = vrot.slane %v246, %v262
      %v264 = vlaneseq
      %v265 = vshrl.u32 %v264, 7
      %v266 = vsub.s32 0, %v265
      %v267 = vrot.slane %v247, %v266
      %v268 = vmul.f32 %v258, %v263
      %v269 = vmul.f32 %v258, %v267
      %v270 = vadd.f32 %v254, %v268
      %v271 = vadd.f32 %v254, %v269
      %272 = vset.pattern.permute.xlu0 1
      %273 = vperm.xlu0 %272, %v250
      %v274 = vpop.permute.xlu0 %273
      %v276 = vlaneseq
      %v277 = vshrl.u32 %v276, 7
      %v278 = vsub.s32 1, %v277
      %v279 = vrot.slane %v246, %v278
      %v280 = vlaneseq
      %v281 = vshrl.u32 %v280, 7
      %v282 = vsub.s32 1, %v281
      %v283 = vrot.slane %v247, %v282
      %v284 = vmul.f32 %v274, %v279
      %v285 = vmul.f32 %v274, %v283
      %v286 = vadd.f32 %v270, %v284
      %v287 = vadd.f32 %v271, %v285
      %288 = vset.pattern.permute.xlu0 2
      %289 = vperm.xlu0 %288, %v250
      %v290 = vpop.permute.xlu0 %289
      %v292 = vlaneseq
      %v293 = vshrl.u32 %v292, 7
      %v294 = vsub.s32 2, %v293
      %v295 = vrot.slane %v246, %v294
      %v296 = vlaneseq
      %v297 = vshrl.u32 %v296, 7
      %v298 = vsub.s32 2, %v297
      %v299 = vrot.slane %v247, %v298
      %v300 = vmul.f32 %v290, %v295
      %v301 = vmul.f32 %v290, %v299
      %v302 = vadd.f32 %v286, %v300
      %v303 = vadd.f32 %v287, %v301
      %304 = vset.pattern.permute.xlu0 3
      %305 = vperm.xlu0 %304, %v250
      %v306 = vpop.permute.xlu0 %305
      %v308 = vlaneseq
      %v309 = vshrl.u32 %v308, 7
      %v310 = vsub.s32 3, %v309
      %v311 = vrot.slane %v246, %v310
      %v312 = vlaneseq
      %v313 = vshrl.u32 %v312, 7
      %v314 = vsub.s32 3, %v313
      %v315 = vrot.slane %v247, %v314
      %v316 = vmul.f32 %v306, %v311
      %v317 = vmul.f32 %v306, %v315
      %v318 = vadd.f32 %v302, %v316
      %v319 = vadd.f32 %v303, %v317
      %320 = vset.pattern.permute.xlu0 4
      %321 = vperm.xlu0 %320, %v250
      %v322 = vpop.permute.xlu0 %321
      %v324 = vlaneseq
      %v325 = vshrl.u32 %v324, 7
      %v326 = vsub.s32 4, %v325
      %v327 = vrot.slane %v246, %v326
      %v328 = vlaneseq
      %v329 = vshrl.u32 %v328, 7
      %v330 = vsub.s32 4, %v329
      %v331 = vrot.slane %v247, %v330
      %v332 = vmul.f32 %v322, %v327
      %v333 = vmul.f32 %v322, %v331
      %v334 = vadd.f32 %v318, %v332
      %v335 = vadd.f32 %v319, %v333
      %336 = vset.pattern.permute.xlu0 5
      %337 = vperm.xlu0 %336, %v250
      %v338 = vpop.permute.xlu0 %337
      %v340 = vlaneseq
      %v341 = vshrl.u32 %v340, 7
      %v342 = vsub.s32 5, %v341
      %v343 = vrot.slane %v246, %v342
      %v344 = vlaneseq
      %v345 = vshrl.u32 %v344, 7
      %v346 = vsub.s32 5, %v345
      %v347 = vrot.slane %v247, %v346
      %v348 = vmul.f32 %v338, %v343
      %v349 = vmul.f32 %v338, %v347
      %v350 = vadd.f32 %v334, %v348
      %v351 = vadd.f32 %v335, %v349
      %352 = vset.pattern.permute.xlu0 6
      %353 = vperm.xlu0 %352, %v250
      %v354 = vpop.permute.xlu0 %353
      %v356 = vlaneseq
      %v357 = vshrl.u32 %v356, 7
      %v358 = vsub.s32 6, %v357
      %v359 = vrot.slane %v246, %v358
      %v360 = vlaneseq
      %v361 = vshrl.u32 %v360, 7
      %v362 = vsub.s32 6, %v361
      %v363 = vrot.slane %v247, %v362
      %v364 = vmul.f32 %v354, %v359
      %v365 = vmul.f32 %v354, %v363
      %v366 = vadd.f32 %v350, %v364
      %v367 = vadd.f32 %v351, %v365
      %368 = vset.pattern.permute.xlu0 7
      %369 = vperm.xlu0 %368, %v250
      %v370 = vpop.permute.xlu0 %369
      %v372 = vlaneseq
      %v373 = vshrl.u32 %v372, 7
      %v374 = vsub.s32 7, %v373
      %v375 = vrot.slane %v246, %v374
      %v376 = vlaneseq
      %v377 = vshrl.u32 %v376, 7
      %v378 = vsub.s32 7, %v377
      %v379 = vrot.slane %v247, %v378
      %v380 = vmul.f32 %v370, %v375
      %v381 = vmul.f32 %v370, %v379
      %v382 = vadd.f32 %v366, %v380
      %v383 = vadd.f32 %v367, %v381
      %384 = vset.pattern.permute.xlu0 8
      %385 = vperm.xlu0 %384, %v250
      %v386 = vpop.permute.xlu0 %385
      %v388 = vlaneseq
      %v389 = vshrl.u32 %v388, 7
      %v390 = vsub.s32 0, %v389
      %v391 = vrot.slane %v248, %v390
      %v392 = vlaneseq
      %v393 = vshrl.u32 %v392, 7
      %v394 = vsub.s32 0, %v393
      %v395 = vrot.slane %v249, %v394
      %v396 = vmul.f32 %v386, %v391
      %v397 = vmul.f32 %v386, %v395
      %v398 = vadd.f32 %v382, %v396
      %v399 = vadd.f32 %v383, %v397
      %400 = vset.pattern.permute.xlu0 9
      %401 = vperm.xlu0 %400, %v250
      %v402 = vpop.permute.xlu0 %401
      %v404 = vlaneseq
      %v405 = vshrl.u32 %v404, 7
      %v406 = vsub.s32 1, %v405
      %v407 = vrot.slane %v248, %v406
      %v408 = vlaneseq
      %v409 = vshrl.u32 %v408, 7
      %v410 = vsub.s32 1, %v409
      %v411 = vrot.slane %v249, %v410
      %v412 = vmul.f32 %v402, %v407
      %v413 = vmul.f32 %v402, %v411
      %v414 = vadd.f32 %v398, %v412
      %v415 = vadd.f32 %v399, %v413
      %416 = vset.pattern.permute.xlu0 10
      %417 = vperm.xlu0 %416, %v250
      %v418 = vpop.permute.xlu0 %417
      %v420 = vlaneseq
      %v421 = vshrl.u32 %v420, 7
      %v422 = vsub.s32 2, %v421
      %v423 = vrot.slane %v248, %v422
      %v424 = vlaneseq
      %v425 = vshrl.u32 %v424, 7
      %v426 = vsub.s32 2, %v425
      %v427 = vrot.slane %v249, %v426
      %v428 = vmul.f32 %v418, %v423
      %v429 = vmul.f32 %v418, %v427
      %v430 = vadd.f32 %v414, %v428
      %v431 = vadd.f32 %v415, %v429
      %432 = vset.pattern.permute.xlu0 11
      %433 = vperm.xlu0 %432, %v250
      %v434 = vpop.permute.xlu0 %433
      %v436 = vlaneseq
      %v437 = vshrl.u32 %v436, 7
      %v438 = vsub.s32 3, %v437
      %v439 = vrot.slane %v248, %v438
      %v440 = vlaneseq
      %v441 = vshrl.u32 %v440, 7
      %v442 = vsub.s32 3, %v441
      %v443 = vrot.slane %v249, %v442
      %v444 = vmul.f32 %v434, %v439
      %v445 = vmul.f32 %v434, %v443
      %v446 = vadd.f32 %v430, %v444
      %v447 = vadd.f32 %v431, %v445
      %448 = vset.pattern.permute.xlu0 12
      %449 = vperm.xlu0 %448, %v250
      %v450 = vpop.permute.xlu0 %449
      %v452 = vlaneseq
      %v453 = vshrl.u32 %v452, 7
      %v454 = vsub.s32 4, %v453
      %v455 = vrot.slane %v248, %v454
      %v456 = vlaneseq
      %v457 = vshrl.u32 %v456, 7
      %v458 = vsub.s32 4, %v457
      %v459 = vrot.slane %v249, %v458
      %v460 = vmul.f32 %v450, %v455
      %v461 = vmul.f32 %v450, %v459
      %v462 = vadd.f32 %v446, %v460
      %v463 = vadd.f32 %v447, %v461
      %464 = vset.pattern.permute.xlu0 13
      %465 = vperm.xlu0 %464, %v250
      %v466 = vpop.permute.xlu0 %465
      %v468 = vlaneseq
      %v469 = vshrl.u32 %v468, 7
      %v470 = vsub.s32 5, %v469
      %v471 = vrot.slane %v248, %v470
      %v472 = vlaneseq
      %v473 = vshrl.u32 %v472, 7
      %v474 = vsub.s32 5, %v473
      %v475 = vrot.slane %v249, %v474
      %v476 = vmul.f32 %v466, %v471
      %v477 = vmul.f32 %v466, %v475
      %v478 = vadd.f32 %v462, %v476
      %v479 = vadd.f32 %v463, %v477
      %480 = vset.pattern.permute.xlu0 14
      %481 = vperm.xlu0 %480, %v250
      %v482 = vpop.permute.xlu0 %481
      %v484 = vlaneseq
      %v485 = vshrl.u32 %v484, 7
      %v486 = vsub.s32 6, %v485
      %v487 = vrot.slane %v248, %v486
      %v488 = vlaneseq
      %v489 = vshrl.u32 %v488, 7
      %v490 = vsub.s32 6, %v489
      %v491 = vrot.slane %v249, %v490
      %v492 = vmul.f32 %v482, %v487
      %v493 = vmul.f32 %v482, %v491
      %v494 = vadd.f32 %v478, %v492
      %v495 = vadd.f32 %v479, %v493
      %496 = vset.pattern.permute.xlu0 15
      %497 = vperm.xlu0 %496, %v250
      %v498 = vpop.permute.xlu0 %497
      %v500 = vlaneseq
      %v501 = vshrl.u32 %v500, 7
      %v502 = vsub.s32 7, %v501
      %v503 = vrot.slane %v248, %v502
      %v504 = vlaneseq
      %v505 = vshrl.u32 %v504, 7
      %v506 = vsub.s32 7, %v505
      %v507 = vrot.slane %v249, %v506
      %v508 = vmul.f32 %v498, %v503
      %v509 = vmul.f32 %v498, %v507
      %v510 = vadd.f32 %v494, %v508
      %v511 = vadd.f32 %v495, %v509
      %v512 = vmax.f32 %v510, 0.0
      %v513 = vmax.f32 %v511, 0.0
      %514 = vset.pattern.permute.xlu0 17
      %515 = vperm.xlu0 %514, %v250
      %v516 = vpop.permute.xlu0 %515
      %v518 = vmul.f32 %v512, %v516
      %v519 = vmul.f32 %v513, %v516
      %vm520 = vcmask 1043456
      %v521 = vsel %vm520, %v518, 0.0
      %v522 = vrot.slane %v521, 4
      %v523 = vadd.f32 %v521, %v522
      %v524 = vrot.slane %v523, 2
      %v525 = vadd.f32 %v523, %v524
      %v526 = vrot.slane %v525, 1
      %v527 = vadd.f32 %v525, %v526
      %v528 = vsel %vm520, %v519, 0.0
      %v529 = vrot.slane %v528, 4
      %v530 = vadd.f32 %v528, %v529
      %v531 = vrot.slane %v530, 2
      %v532 = vadd.f32 %v530, %v531
      %v533 = vrot.slane %v532, 1
      %v534 = vadd.f32 %v532, %v533
      %535 = vset.pattern.permute.xlu0 18
      %536 = vperm.xlu0 %535, %v250
      %v537 = vpop.permute.xlu0 %536
      %v539 = vadd.f32 %v527, %v537
      %v540 = vadd.f32 %v534, %v537
      %v541 = vxor.u32 %v539, 2147483648
      %v542 = vxor.u32 %v540, 2147483648
      %v543 = vmul.f32 %v541, 1.442695
      %v544 = vpow.pop %v543
      %v545 = vmul.f32 %v542, 1.442695
      %v546 = vpow.pop %v545
      %v547 = vadd.f32 %v544, 1.0
      %v548 = vadd.f32 %v546, 1.0
      %v549 = vrcp.pop %v547
      %v550 = vmul.f32 1.0, %v549
      %v551 = vrcp.pop %v548
      %v552 = vmul.f32 1.0, %v551
      %v553 = vlaneseq
      %v554 = vshrl.u32 %v553, 7
      %v555 = vsub.s32 0, %v554
      %v556 = vrot.slane %v550, %v555
      %v557 = vlaneseq
      %v558 = vshrl.u32 %v557, 7
      %v559 = vsub.s32 0, %v558
      %v560 = vrot.slane %v552, %v559
      %v561 = vmul.f32 %v248, %v556
      %v562 = vmul.f32 %v249, %v560
      %563 = vst [vmem:[%s244] sm:$0xff] %v561
      %564 = vst [vmem:[%s244 + $0x8] sm:$0xff] %v562
      %s565 = smul.u32 2, %s19
      %p566 = scmp.lt.s32.totalorder %s18, 1
      %s567 = scalar_select %p566, %s18, 1
      %p568 = scmp.lt.s32.totalorder %s565, 1
      %s569 = scalar_select %p568, %s565, 1
      %s570 = smul.addr %s567, 2
      %s571 = sadd.s32 %s569, %s570
      %s572 = smul.addr %s571, 8
      %s573 = scalar_lea.vmem %s3, %s572
      // Predicated region
      $region33: #{attention_block.1} parent=31 // pred_check
        %p574 = pneg %p123
      $region34: #{attention_block.1} parent=31 // pred_check_branch
        %576 = sbr.rel (%p574) target = $region36
      $region35: #{attention_block.1} parent=31 // pred_region
        %s577 = smul.u32 2, %s19
      $region36: #{attention_block.1} parent=31 // pred_fallthru
        _
    $region32: #{attention_block.1} parent=5 // pred_fallthru
      _
    %p578 = scmp.le.s32.totalorder 2, %s9
    // Predicated region
    $region37: #{attention_block.1} parent=5 // pred_check
      %p579 = pneg %p578
    $region38: #{attention_block.1} parent=5 // pred_check_branch
      %581 = sbr.rel (%p579) target = $region40
    $region39: #{attention_block.1} parent=5 // pred_region
      %s582 = ssub.s32 %s9, 2
      // Predicated region
      $region41: #{attention_block.1} parent=39 // pred_check
        %p583 = pneg %p129
      $region42: #{attention_block.1} parent=39 // pred_check_branch
        %585 = sbr.rel (%p583) target = $region44
      $region43: #{attention_block.1} parent=39 // pred_region
        %s586 = smul.u32 2, %s21
        %p587 = scmp.lt.s32.totalorder %s20, 1
        %s588 = scalar_select %p587, %s20, 1
        %p589 = scmp.lt.s32.totalorder %s586, 1
        %s590 = scalar_select %p589, %s586, 1
        %s591 = smul.addr %s588, 2
        %s592 = sadd.s32 %s590, %s591
        %s593 = smul.addr %s592, 8
        %s594 = scalar_lea.vmem %s3, %s593
      $region44: #{attention_block.1} parent=39 // pred_fallthru
        _
    $region40: #{attention_block.1} parent=5 // pred_fallthru
      _
  $region6: #{attention_block.1} parent=0 // loop_footer
    %s13 = sadd.s32 1, %s9
  $region7: #{attention_block.1} parent=0 // loop_footer_branch
    %8 = sbr.rel target = $region3
  $region8: #{attention_block.1} parent=0 // loop_exit
    _

</llo_original>
